<compile_context>
chip_gen: v7x
topology: tpu7x:2x2x1
jax: 0.10.0
libtpu: 0.0.40
codegen_flags: <defaults>
</compile_context>

<pallas_src>
import functools
import math

import jax
import jax.numpy as jnp
from jax.experimental import pallas as pl
from jax.experimental.pallas import tpu as pltpu


def _build_pe(d_model: int, max_len: int = 2000) -> jnp.ndarray:
    """Sinusoidal positional-encoding buffer, shape (max_len, d_model).

    Mirrors the PyTorch __init__:
        pe[:, 0::2] = sin(position * div_term)
        pe[:, 1::2] = cos(position * div_term)
    """
    position = jnp.arange(max_len, dtype=jnp.float32)[:, None]
    div_term = jnp.exp(
        jnp.arange(0, d_model, 2, dtype=jnp.float32) * (-math.log(10000.0) / d_model)
    )
    angles = position * div_term
    n_sin = (d_model + 1) // 2
    n_cos = d_model // 2
    pe = jnp.zeros((max_len, d_model), dtype=jnp.float32)
    pe = pe.at[:, 0::2].set(jnp.sin(angles[:, :n_sin]))
    pe = pe.at[:, 1::2].set(jnp.cos(angles[:, :n_cos]))
    return pe


def _round_up(x: int, m: int) -> int:
    return -(-x // m) * m


def _sublanes(itemsize: int) -> int:
    # f32 -> 8 sublanes per tile, bf16 -> 16, int8/fp8 -> 32.
    return max(8, 32 // max(itemsize, 1))


def _chip_tuning():
    """(target x-block bytes, is_multi_tensorcore_chip). Best effort, safe default."""
    vmem = None
    try:
        info = pltpu.get_tpu_info()
        vmem = getattr(info, "vmem_capacity_bytes", None)
    except Exception:
        vmem = None
    if vmem is not None and vmem <= 80 * 1024 * 1024:
        # v7x: 64 MiB VMEM/TC, fast HBM, 2 TCs -> bigger blocks, split grid.
        return 7 * 1024 * 1024, True
    # v5e / v6e: 128 MiB physical VMEM, 1 TC.
    return 5 * 1024 * 1024, False


def _choose_fold(batch: int, length: int, sub: int) -> int:
    """Fold factor G so (batch * G) is a multiple of the sublane count.

    Requires G to divide length so the (B, L) -> (B*G, L/G) reshape is exact.
    """
    g = sub // math.gcd(batch, sub)
    if g > 1 and length % g == 0:
        return g
    return 1


def _add_pe_kernel(x_ref, pe_ref, o_ref, *, reps):
    # x_ref: (RB, tile) lane-dense block; pe_ref: (G, tile), tiled over batch.
    pe = pe_ref[...]
    if reps > 1:
        pe = jnp.tile(pe, (reps, 1))
    o_ref[...] = (x_ref[...] + pe).astype(o_ref.dtype)


def _positional_encoding_pallas(x: jnp.ndarray, pe: jnp.ndarray) -> jnp.ndarray:
    B, S, D = x.shape
    L = S * D
    x_itemsize = jnp.dtype(x.dtype).itemsize
    sub = _sublanes(x_itemsize)
    # Match PyTorch type promotion (bf16 x + f32 pe -> f32 result).
    out_dtype = jnp.promote_types(x.dtype, pe.dtype)

    target_bytes, multi_tc = _chip_tuning()

    # Fold part of the flattened S*D axis into the sublane (row) axis so rows
    # fill the (8/16, 128) tiling; otherwise small B wastes most of every vreg.
    G = _choose_fold(B, L, sub)
    rows, Lr = B * G, L // G
    x2d = x.reshape(rows, Lr)
    pe2d = pe[:S, :].reshape(G, Lr)  # kept in f32; add promotes in-kernel

    # ---- lane tile: lane-dense, >= ~2 KiB per-row DMA segment, ~target bytes.
    lane_floor = max(128, _round_up(2048 // x_itemsize, 128))
    rows_p = _round_up(rows, sub)
    if Lr <= lane_floor:
        tile = Lr  # full extent: always a legal block shape
    else:
        t = (target_bytes // (rows_p * x_itemsize)) // 128 * 128
        tile = min(max(lane_floor, t), _round_up(Lr, 128))

    # ---- row tile: only needed when even a lane_floor-wide block blows budget.
    RB = rows
    if rows > sub and rows_p * tile * x_itemsize > (3 * target_bytes) // 2:
        RB = max(sub, (target_bytes // (tile * x_itemsize)) // sub * sub)

    n_row = pl.cdiv(rows, RB)
    n_lane = pl.cdiv(Lr, tile)

    # v7x has 2 TensorCores: make sure the parallel grid has >= 2 blocks.
    if multi_tc and n_row * n_lane == 1 and Lr >= 2 * lane_floor:
        tile = _round_up(pl.cdiv(Lr, 2), 128)
        n_lane = pl.cdiv(Lr, tile)

    # Honest, sublane/lane-padded, double-buffered VMEM budget.
    def _padded(r, c, itemsize):
        s = _sublanes(itemsize)
        return _round_up(r, s) * _round_up(c, 128) * itemsize

    block_bytes = (
        _padded(RB, tile, x_itemsize)
        + _padded(RB, tile, jnp.dtype(out_dtype).itemsize)
        + _padded(G, tile, jnp.dtype(pe.dtype).itemsize)
    )
    vmem_limit = int(
        min(56 * 1024 * 1024, max(32 * 1024 * 1024, (2 * block_bytes * 3) // 2))
    )

    out2d = pl.pallas_call(
        functools.partial(_add_pe_kernel, reps=RB // G),
        out_shape=jax.ShapeDtypeStruct((rows, Lr), out_dtype),
        grid_spec=pltpu.PrefetchScalarGridSpec(
            num_scalar_prefetch=0,
            grid=(n_row, n_lane),
            in_specs=[
                pl.BlockSpec((RB, tile), lambda r, l: (r, l)),  # x: full rows per block
                pl.BlockSpec((G, tile), lambda r, l: (0, l)),   # pe: streamed once per row pass
            ],
            out_specs=pl.BlockSpec((RB, tile), lambda r, l: (r, l)),
        ),
        compiler_params=pltpu.CompilerParams(
            dimension_semantics=("parallel", "parallel"),
            vmem_limit_bytes=vmem_limit,
        ),
    )(x2d, pe2d)
    return out2d.reshape(B, S, D)


# Below ~256 KiB of activations the kernel is pure launch/step overhead; let
# XLA fuse the add instead (unless forced, e.g. for testing).
_PALLAS_MIN_BYTES = 256 * 1024


def positional_encoding_forward(x: jnp.ndarray, pe: jnp.ndarray,
                                *, force_pallas: bool = False) -> jnp.ndarray:
    """x: (B, S, D); pe: (max_len, D). Returns x + pe[None, :S, :]."""
    if not force_pallas and x.size * jnp.dtype(x.dtype).itemsize < _PALLAS_MIN_BYTES:
        return x + pe[None, : x.shape[1], :]
    return _positional_encoding_pallas(x, pe)


if __name__ == "__main__":
    # Small shapes consistent with the module: batch=2, seq=8, d_model=32.
    B, S, D = 2, 8, 32
    MAX_LEN = 2000

    key = jax.random.PRNGKey(0)
    x = jax.random.normal(key, (B, S, D), dtype=jnp.float32)

    pe = _build_pe(D, MAX_LEN)

    # Force the Pallas path so the kernel is actually exercised at toy shapes.
    out = positional_encoding_forward(x, pe, force_pallas=True)
    out = jax.block_until_ready(out)

    # Reference check in plain JAX (same math as the PyTorch forward).
    ref = x + pe[None, :S, :]
    assert out.shape == ref.shape and out.dtype == ref.dtype
    assert jnp.allclose(out, ref, atol=1e-6, rtol=1e-6), "mismatch vs reference"

    print("KERNEL_OK")
</pallas_src>

<mosaic_0001>
module attributes {stable_mosaic.version = 11 : i64} {
  func.func @_add_pe_kernel(%arg0: i32, %arg1: i32, %arg2: memref<8x64xf32, #tpu.memory_space<vmem>>, %arg3: memref<4x64xf32, #tpu.memory_space<vmem>>, %arg4: memref<8x64xf32, #tpu.memory_space<vmem>>) attributes {dimension_semantics = [#tpu.dimension_semantics<parallel>, #tpu.dimension_semantics<parallel>], iteration_bounds = array<i64: 1, 1>, scalar_prefetch = 0 : i64, scratch_operands = 0 : i64, tpu.core_type = #tpu.core_type<tc>, window_params = [{transform_indices = @transform_0, window_bounds = array<i64: 8, 64>}, {transform_indices = @transform_1, window_bounds = array<i64: 4, 64>}, {transform_indices = @transform_2, window_bounds = array<i64: 8, 64>}]} {
    %c0 = arith.constant 0 : index
    %c0_0 = arith.constant 0 : index
    %0 = vector.load %arg3[%c0, %c0_0] : memref<4x64xf32, #tpu.memory_space<vmem>>, vector<4x64xf32>
    %1 = tpu.concatenate %0, %0 in 0 : vector<4x64xf32>, vector<4x64xf32> -> vector<8x64xf32>
    %c0_1 = arith.constant 0 : index
    %c0_2 = arith.constant 0 : index
    %2 = vector.load %arg2[%c0_1, %c0_2] : memref<8x64xf32, #tpu.memory_space<vmem>>, vector<8x64xf32>
    %3 = arith.addf %2, %1 : vector<8x64xf32>
    %c0_3 = arith.constant 0 : index
    %c0_4 = arith.constant 0 : index
    %4 = vector.load %arg4[%c0_3, %c0_4] : memref<8x64xf32, #tpu.memory_space<vmem>>, vector<8x64xf32>
    tpu.vector_store %arg4[%c0_3, %c0_4], %3 {strides = array<i32>} : memref<8x64xf32, #tpu.memory_space<vmem>>, vector<8x64xf32>,
    return
  }
  func.func @transform_0(%arg0: i32, %arg1: i32) -> (i32, i32) {
    %c0_i32 = arith.constant 0 : i32
    return %arg0, %arg1 : i32, i32
  }
  func.func @transform_1(%arg0: i32, %arg1: i32) -> (i32, i32) {
    %c0_i32 = arith.constant 0 : i32
    %c0_i32_0 = arith.constant 0 : i32
    return %c0_i32, %arg1 : i32, i32
  }
  func.func @transform_2(%arg0: i32, %arg1: i32) -> (i32, i32) {
    %c0_i32 = arith.constant 0 : i32
    return %arg0, %arg1 : i32, i32
  }
}

</mosaic_0001>

<llo_original>
// kernel: tpu_custom_call.1
$region0: #{tpu_custom_call.1}
  #allocation0 [shape = 'u32[]', space=smem, size = 0x4, offset = 0x4, fixed_abs, tag = 'smem constant byte address 0x4 - core index']
  #allocation1 [shape = 'u32[144,128]{1,0:T(1,128)}', space=vmem, size = 0x12000, scoped, tag = 'internal scratch']
  %s0 = inlined_call_operand.hbm [shape: f32[8,64], index: 0, kind: input, shape index: {}]
  %s1 = inlined_call_operand.hbm [shape: f32[4,64], index: 1, kind: input, shape index: {}]
  %s2 = inlined_call_operand.hbm [shape: f32[8,64], index: 2, kind: output, shape index: {}]
  %s3 = sld [smem:[#allocation0]]
  $region26: #{tpu_custom_call.1} parent=0
    _
  %s5 = ssub.s32 1, %s3
  %s6 = scalar_select 0, %s5, %s3
  $region1: #{tpu_custom_call.1} parent=0
    #allocation2 [shape = 'u8[4096]{0}', space=vmem, size = 0x1000, scoped, tag = 'input window, operand 0, single buffered']
    #allocation3 [shape = 's32[1]{0}', space=sflag, size = 0x4, scoped, tag = 'scoped memory for tpu_custom_call.1']
    #allocation4 [shape = 's32[1]{0}', space=sflag, size = 0x4, scoped, tag = 'scoped memory for tpu_custom_call.1']
    #allocation5 [shape = 'u8[2048]{0}', space=vmem, size = 0x800, scoped, tag = 'input window, operand 1, single buffered']
    #allocation6 [shape = 's32[1]{0}', space=sflag, size = 0x4, scoped, tag = 'scoped memory for tpu_custom_call.1']
    #allocation7 [shape = 'u8[4096]{0}', space=vmem, size = 0x1000, scoped, tag = 'output window, operand 0, single buffered']
    %7 = vsyncpa [#allocation3], 0
    %8 = vsyncpa [#allocation6], 0
    %9 = vsyncpa [#allocation4], 0
    // Predicated region
    $region2: #{tpu_custom_call.1} parent=1 // pred_check
      _
    $region3: #{tpu_custom_call.1} parent=1 // pred_check_branch
      %11 = sbr.rel (0) target = $region5
    $region4: #{tpu_custom_call.1} parent=1 // pred_region
      %s13 = ssub.s32 128, 128
      %14 = vsyncadd [#allocation3], %s13
      %s16 = sshll.u32 [#allocation2], 4
      %s17 = int_to_ptr.vmem [resolvable:$true] %s16
      %19 = dma.hbm_to_vmem [thread:$0]  %s0, 128, %s17, [#allocation3]
    $region5: #{tpu_custom_call.1} parent=1 // pred_fallthru
      _
    // Predicated region
    $region6: #{tpu_custom_call.1} parent=1 // pred_check
      _
    $region7: #{tpu_custom_call.1} parent=1 // pred_check_branch
      %21 = sbr.rel (0) target = $region9
    $region8: #{tpu_custom_call.1} parent=1 // pred_region
      %s23 = ssub.s32 64, 64
      %24 = vsyncadd [#allocation6], %s23
      %s26 = sshll.u32 [#allocation5], 4
      %s27 = int_to_ptr.vmem [resolvable:$true] %s26
      %29 = dma.hbm_to_vmem [thread:$0]  %s1, 64, %s27, [#allocation6]
    $region9: #{tpu_custom_call.1} parent=1 // pred_fallthru
      _
    // Predicated region
    $region10: #{tpu_custom_call.1} parent=1 // pred_check
      _
    $region11: #{tpu_custom_call.1} parent=1 // pred_check_branch
      %31 = sbr.rel (0) target = $region13
    $region12: #{tpu_custom_call.1} parent=1 // pred_region
      %32 = dma.done [#allocation3], 128
    $region13: #{tpu_custom_call.1} parent=1 // pred_fallthru
      _
    // Predicated region
    $region14: #{tpu_custom_call.1} parent=1 // pred_check
      _
    $region15: #{tpu_custom_call.1} parent=1 // pred_check_branch
      %34 = sbr.rel (0) target = $region17
    $region16: #{tpu_custom_call.1} parent=1 // pred_region
      %35 = dma.done [#allocation6], 64
    $region17: #{tpu_custom_call.1} parent=1 // pred_fallthru
      _
    %v36 = vld [vmem:[#allocation5] sm:$0xf]
    %v38 = vrot.slane %v36, 4
    %vm40 = vcmask 1043456
    %v41 = vsel %vm40, %v36, %v38
    %v42 = vld [vmem:[#allocation2] sm:$0xff]
    %v43 = vadd.f32 %v42, %v41
    %vm44 = vcmask 523264
    %45 = vst.msk [vmem:[#allocation7] sm:$0xff] %vm44, %v43
    // Predicated region
    $region18: #{tpu_custom_call.1} parent=1 // pred_check
      _
    $region19: #{tpu_custom_call.1} parent=1 // pred_check_branch
      %47 = sbr.rel (0) target = $region21
    $region20: #{tpu_custom_call.1} parent=1 // pred_region
      %s49 = ssub.s32 128, 128
      %50 = vsyncadd [#allocation4], %s49
      %s52 = sshll.u32 [#allocation7], 4
      %s53 = int_to_ptr.vmem [resolvable:$true] %s52
      %55 = dma.vmem_to_hbm [thread:$0]  %s53, 128, %s2, [#allocation4]
    $region21: #{tpu_custom_call.1} parent=1 // pred_fallthru
      _
    // Predicated region
    $region22: #{tpu_custom_call.1} parent=1 // pred_check
      _
    $region23: #{tpu_custom_call.1} parent=1 // pred_check_branch
      %57 = sbr.rel (0) target = $region25
    $region24: #{tpu_custom_call.1} parent=1 // pred_region
      %58 = dma.done [#allocation4], 128
    $region25: #{tpu_custom_call.1} parent=1 // pred_fallthru
      _
    %59 = vsyncpa [#allocation3], 1
    %60 = vsyncpa [#allocation6], 1
    %61 = vsyncpa [#allocation4], 1

</llo_original>
